<compile_context>
chip_gen: v7x
topology: tpu7x:2x2x1
jax: 0.10.0
libtpu: 0.0.40
codegen_flags: <defaults>
</compile_context>

<pallas_src>
import functools

import jax
import jax.numpy as jnp
from jax.experimental import pallas as pl
from jax.experimental.pallas import tpu as pltpu


def _attention_in_bag_kernel(bag_ref, w1_ref, b1_ref, w2_ref, out_ref,
                             m_ref, l_ref, acc_ref, *, n_total, tn,
                             compute_dtype):
    ni = pl.program_id(1)
    n_tiles = pl.num_programs(1)

    # Per-bag online-softmax state, initialised at the first instance tile.
    @pl.when(ni == 0)
    def _init():
        m_ref[...] = jnp.full_like(m_ref, -jnp.inf)
        l_ref[...] = jnp.zeros_like(l_ref)
        acc_ref[...] = jnp.zeros_like(acc_ref)

    def _tile_update(bag, valid):
        # ascend_dim: Linear + LeakyReLU(0.2).  MXU contraction, f32 accumulate.
        h = jnp.dot(bag, w1_ref[...],
                    preferred_element_type=jnp.float32) + b1_ref[...]
        h = jnp.maximum(h, 0.2 * h)                              # (tn, dout) f32

        # compute_e: 1-wide projection as VPU multiply + lane reduce.
        # b2 is omitted: a constant logit shift cancels in softmax.
        e = jnp.sum(h * w2_ref[...], axis=-1, keepdims=True)     # (tn, 1)
        if valid is not None:
            e = jnp.where(valid, e, -jnp.inf)                    # padded -> weight 0

        # Online softmax accumulation over the instance tiles.
        m_prev = m_ref[...]                                              # (1, 1)
        m_new = jnp.maximum(m_prev, jnp.max(e, axis=0, keepdims=True))   # (1, 1)
        rescale = jnp.exp(m_prev - m_new)
        p = jnp.exp(e - m_new)                                           # (tn, 1)
        l_ref[...] = rescale * l_ref[...] + jnp.sum(p, axis=0, keepdims=True)
        # Weighted sum over the instance (sublane) axis on the idle MXU:
        # ones(1, tn) @ (p*h) == sum_n p_n * h_n — avoids a cross-sublane
        # VPU/XLU reduction that grows linearly with tn.
        ones_row = jnp.ones((1, tn), jnp.float32)
        acc_delta = jnp.dot(ones_row, p * h,
                            preferred_element_type=jnp.float32)          # (1, dout)
        acc_ref[...] = rescale * acc_ref[...] + acc_delta
        m_ref[...] = m_new

    ragged = (n_total % tn) != 0
    if not ragged:
        _tile_update(bag_ref[0].astype(compute_dtype), None)
    else:
        # Unmasked fast path for all full tiles ...
        @pl.when(ni < n_tiles - 1)
        def _full_tile():
            _tile_update(bag_ref[0].astype(compute_dtype), None)

        # ... masked path only for the ragged last tile: zero padded rows so h
        # stays finite, and push their logits to -inf so their weight is 0.
        @pl.when(ni == n_tiles - 1)
        def _last_tile():
            row = ni * tn + jax.lax.broadcasted_iota(jnp.int32, (tn, 1), 0)
            valid = row < n_total                                 # (tn, 1)
            bag = jnp.where(valid, bag_ref[0], 0).astype(compute_dtype)
            _tile_update(bag, valid)

    @pl.when(ni == n_tiles - 1)
    def _finalize():
        # Exact divide (one (1, dout) op per bag) for strict parity with the
        # PyTorch softmax; approx reciprocal is not worth its ~1e-3 error here.
        out_ref[...] = (acc_ref[...] / l_ref[...])[None].astype(out_ref.dtype)


def attention_in_bags(bags, w1, b1, w2, *, tn=1024, use_bf16=False):
    """Batched bags.

    bags: (B, N, Din) — streamed in their native dtype (upcast per-tile in
                        VMEM, matching the module's bag.float()).
    w1: (Din, Dout) ; b1: (Dout,) ; w2: (Dout,)
    use_bf16: opt-in bf16 MXU contraction for the W1 matmul (f32 accumulate,
              f32 softmax state) — halves bag HBM traffic when bags are bf16.
    returns (B, Dout) — row b is AttentionInBag.forward(bags[b]).
    """
    b, n, din = bags.shape
    dout = w1.shape[1]

    # Big instance tiles: per-grid-step overhead (~0.35 us) and DMA latency
    # dominate below ~512 rows at small Din; VMEM is never the constraint.
    tn = min(int(tn), n)
    if tn != n and tn % 8 != 0:        # block dim: multiple of 8 unless == full dim
        tn = max(8, (tn // 8) * 8)
    n_tiles = pl.cdiv(n, tn)

    compute_dtype = jnp.bfloat16 if use_bf16 else jnp.float32
    kernel = functools.partial(_attention_in_bag_kernel, n_total=n, tn=tn,
                               compute_dtype=compute_dtype)

    # Instance tiles of the bag, pipelined along N.  When tiles are small
    # (latency-dominated DMA) and there are several of them, go 3-deep.
    bag_index_map = lambda bi, ni: (bi, ni, 0)
    bag_spec = pl.BlockSpec((1, tn, din), bag_index_map)
    tile_bytes = tn * din * jnp.dtype(bags.dtype).itemsize
    if n_tiles > 2 and tile_bytes <= 64 * 1024:
        try:
            bag_spec = pl.BlockSpec((1, tn, din), bag_index_map,
                                    pipeline_mode=pl.Buffered(3))
        except (TypeError, AttributeError):
            pass                        # older jax: keep default double-buffering

    grid_spec = pltpu.PrefetchScalarGridSpec(
        num_scalar_prefetch=0,
        grid=(b, n_tiles),
        in_specs=[
            bag_spec,
            # weights/bias: constant index_map -> resident in VMEM across steps
            pl.BlockSpec((din, dout), lambda bi, ni: (0, 0)),
            pl.BlockSpec((1, dout), lambda bi, ni: (0, 0)),
            pl.BlockSpec((1, dout), lambda bi, ni: (0, 0)),
        ],
        out_specs=pl.BlockSpec((1, 1, dout), lambda bi, ni: (bi, 0, 0)),
        scratch_shapes=[
            pltpu.VMEM((1, 1), jnp.float32),      # running max
            pltpu.VMEM((1, 1), jnp.float32),      # running sum
            pltpu.VMEM((1, dout), jnp.float32),   # weighted-h accumulator
        ],
    )

    out = pl.pallas_call(
        kernel,
        out_shape=jax.ShapeDtypeStruct((b, 1, dout), jnp.float32),
        grid_spec=grid_spec,
        compiler_params=pltpu.CompilerParams(
            dimension_semantics=("parallel", "arbitrary"),
            vmem_limit_bytes=32 * 1024 * 1024,    # v7x-safe; working set << limit
        ),
    )(
        bags,                                     # native dtype, no wrapper cast
        w1.astype(compute_dtype),
        b1.reshape(1, dout).astype(jnp.float32),
        w2.reshape(1, dout).astype(jnp.float32),
    )
    return out.reshape(b, dout)


def attention_in_bag(bag, w1, b1, w2, b2=None, **kwargs):
    """Single bag, matches the PyTorch module: bag (N, Din) -> (1, Dout).

    b2 is accepted for API parity but unused: adding a scalar to every logit
    is a no-op under softmax.
    """
    del b2
    return attention_in_bags(bag[None], w1, b1, w2, **kwargs)


def _reference(bag, w1, b1, w2, b2):
    h = bag.astype(jnp.float32) @ w1 + b1
    h = jnp.where(h > 0, h, 0.2 * h)
    e = (h @ w2.reshape(-1, 1) + b2).reshape(1, -1)
    alpha = jax.nn.softmax(e, axis=1)
    return alpha @ h


if __name__ == "__main__":
    AGG_IN, AGG_OUT = 32, 64

    key = jax.random.PRNGKey(0)
    k_bag, k_w1, k_b1, k_w2, k_b2, k_big = jax.random.split(key, 6)

    lim1 = 1.0 / (AGG_IN ** 0.5)
    lim2 = 1.0 / (AGG_OUT ** 0.5)
    w1 = jax.random.uniform(k_w1, (AGG_IN, AGG_OUT), jnp.float32, -lim1, lim1)
    b1 = jax.random.uniform(k_b1, (AGG_OUT,), jnp.float32, -lim1, lim1)
    w2 = jax.random.uniform(k_w2, (AGG_OUT,), jnp.float32, -lim2, lim2)
    b2 = jax.random.uniform(k_b2, (), jnp.float32, -lim2, lim2)

    # 1) Single small bag (module-sized): N = 8 instances -> (1, 64).
    bag = jax.random.normal(k_bag, (8, AGG_IN), dtype=jnp.float32)
    out = jax.block_until_ready(attention_in_bag(bag, w1, b1, w2, b2))
    ref = _reference(bag, w1, b1, w2, b2)
    assert out.shape == (1, AGG_OUT)
    assert jnp.allclose(out, ref, atol=1e-4, rtol=1e-4), (out, ref)

    # 2) Batched bags, default tile (clamps to N=200 -> one big tile per bag),
    #    exercising the parallel bag grid axis.
    bags = jax.random.normal(k_big, (2, 200, AGG_IN), dtype=jnp.float32)
    refs = jnp.concatenate(
        [_reference(bags[i], w1, b1, w2, b2) for i in range(bags.shape[0])], axis=0)
    outs = jax.block_until_ready(attention_in_bags(bags, w1, b1, w2))
    assert outs.shape == (2, AGG_OUT)
    assert jnp.allclose(outs, refs, atol=1e-4, rtol=1e-4), (outs, refs)

    # 3) Forced small tile: tn=64 -> 4 tiles per bag, ragged masked last tile,
    #    unmasked fast path for full tiles, and the 3-deep buffered DMA path.
    outs_t = jax.block_until_ready(attention_in_bags(bags, w1, b1, w2, tn=64))
    assert outs_t.shape == (2, AGG_OUT)
    assert jnp.allclose(outs_t, refs, atol=1e-4, rtol=1e-4), (outs_t, refs)

    # 4) Opt-in bf16 contraction (v6e/v7x fast path): looser tolerance.
    outs_bf = jax.block_until_ready(
        attention_in_bags(bags, w1, b1, w2, use_bf16=True))
    assert outs_bf.shape == (2, AGG_OUT)
    assert jnp.allclose(outs_bf, refs, atol=5e-2, rtol=5e-2), (outs_bf, refs)

    print("KERNEL_OK")
</pallas_src>

<mosaic_0001>
module attributes {stable_mosaic.version = 11 : i64} {
  func.func @_attention_in_bag_kernel(%arg0: i32, %arg1: i32, %arg2: memref<1x8x32xf32, #tpu.memory_space<vmem>>, %arg3: memref<32x64xf32, #tpu.memory_space<vmem>>, %arg4: memref<1x64xf32, #tpu.memory_space<vmem>>, %arg5: memref<1x64xf32, #tpu.memory_space<vmem>>, %arg6: memref<1x1x64xf32, #tpu.memory_space<vmem>>, %arg7: memref<1x1xf32, #tpu.memory_space<vmem>>, %arg8: memref<1x1xf32, #tpu.memory_space<vmem>>, %arg9: memref<1x64xf32, #tpu.memory_space<vmem>>) attributes {dimension_semantics = [#tpu.dimension_semantics<parallel>, #tpu.dimension_semantics<arbitrary>], iteration_bounds = array<i64: 1, 1>, scalar_prefetch = 0 : i64, scratch_operands = 3 : i64, tpu.core_type = #tpu.core_type<tc>, window_params = [{transform_indices = @transform_0, window_bounds = array<i64: 1, 8, 32>}, {pipeline_mode = #tpu.pipeline_mode<synchronous>, transform_indices = @transform_1, window_bounds = array<i64: 32, 64>}, {pipeline_mode = #tpu.pipeline_mode<synchronous>, transform_indices = @transform_2, window_bounds = array<i64: 1, 64>}, {pipeline_mode = #tpu.pipeline_mode<synchronous>, transform_indices = @transform_3, window_bounds = array<i64: 1, 64>}, {transform_indices = @transform_4, window_bounds = array<i64: 1, 1, 64>}]} {
    %c0_i32 = arith.constant 0 : i32
    %0 = arith.cmpi eq, %arg1, %c0_i32 : i32
    %1 = arith.extui %0 : i1 to i32
    %c0_i32_0 = arith.constant 0 : i32
    %2 = arith.cmpi ne, %1, %c0_i32_0 : i32
    scf.if %2 {
      %cst_29 = arith.constant 0xFF800000 : f32
      %46 = vector.broadcast %cst_29 : f32 to vector<1x1xf32>
      %c0_30 = arith.constant 0 : index
      %c0_31 = arith.constant 0 : index
      %47 = vector.load %arg7[%c0_30, %c0_31] : memref<1x1xf32, #tpu.memory_space<vmem>>, vector<1x1xf32>
      tpu.vector_store %arg7[%c0_30, %c0_31], %46 {strides = array<i32>} : memref<1x1xf32, #tpu.memory_space<vmem>>, vector<1x1xf32>,
      %cst_32 = arith.constant 0.000000e+00 : f32
      %48 = vector.broadcast %cst_32 : f32 to vector<1x1xf32>
      %c0_33 = arith.constant 0 : index
      %c0_34 = arith.constant 0 : index
      %49 = vector.load %arg8[%c0_33, %c0_34] : memref<1x1xf32, #tpu.memory_space<vmem>>, vector<1x1xf32>
      tpu.vector_store %arg8[%c0_33, %c0_34], %48 {strides = array<i32>} : memref<1x1xf32, #tpu.memory_space<vmem>>, vector<1x1xf32>,
      %cst_35 = arith.constant 0.000000e+00 : f32
      %50 = vector.broadcast %cst_35 : f32 to vector<1x64xf32>
      %c0_36 = arith.constant 0 : index
      %c0_37 = arith.constant 0 : index
      %51 = vector.load %arg9[%c0_36, %c0_37] : memref<1x64xf32, #tpu.memory_space<vmem>>, vector<1x64xf32>
      tpu.vector_store %arg9[%c0_36, %c0_37], %50 {strides = array<i32>} : memref<1x64xf32, #tpu.memory_space<vmem>>, vector<1x64xf32>,
    } else {
    }
    %c0 = arith.constant 0 : index
    %c0_1 = arith.constant 0 : index
    %c0_2 = arith.constant 0 : index
    %3 = vector.load %arg2[%c0, %c0_1, %c0_2] : memref<1x8x32xf32, #tpu.memory_space<vmem>>, vector<1x8x32xf32>
    %4 = vector.shape_cast %3 : vector<1x8x32xf32> to vector<8x32xf32>
    %c0_3 = arith.constant 0 : index
    %c0_4 = arith.constant 0 : index
    %5 = vector.load %arg3[%c0_3, %c0_4] : memref<32x64xf32, #tpu.memory_space<vmem>>, vector<32x64xf32>
    %cst = arith.constant dense<0.000000e+00> : vector<8x64xf32>
    %6 = tpu.matmul %4, %5, %cst {dimension_numbers = #tpu.dot_dimension_numbers<[1], [0], [0], [1], [0, 0, 1, 1], [], []>} : vector<8x32xf32>, vector<32x64xf32>, vector<8x64xf32> -> vector<8x64xf32>
    %c0_5 = arith.constant 0 : index
    %c0_6 = arith.constant 0 : index
    %7 = vector.load %arg4[%c0_5, %c0_6] : memref<1x64xf32, #tpu.memory_space<vmem>>, vector<1x64xf32>
    %8 = vector.broadcast %7 : vector<1x64xf32> to vector<8x64xf32>
    %9 = arith.addf %6, %8 : vector<8x64xf32>
    %cst_7 = arith.constant 2.000000e-01 : f32
    %10 = vector.broadcast %cst_7 : f32 to vector<8x64xf32>
    %11 = arith.mulf %10, %9 : vector<8x64xf32>
    %12 = arith.maximumf %9, %11 : vector<8x64xf32>
    %c0_8 = arith.constant 0 : index
    %c0_9 = arith.constant 0 : index
    %13 = vector.load %arg5[%c0_8, %c0_9] : memref<1x64xf32, #tpu.memory_space<vmem>>, vector<1x64xf32>
    %14 = vector.broadcast %13 : vector<1x64xf32> to vector<8x64xf32>
    %15 = arith.mulf %12, %14 : vector<8x64xf32>
    %cst_10 = arith.constant dense<0.000000e+00> : vector<8xf32>
    %16 = vector.multi_reduction <add>, %15, %cst_10 [1] : vector<8x64xf32> to vector<8xf32>
    %17 = vector.shape_cast %16 : vector<8xf32> to vector<8x1xf32>
    %c0_11 = arith.constant 0 : index
    %c0_12 = arith.constant 0 : index
    %18 = vector.load %arg7[%c0_11, %c0_12] : memref<1x1xf32, #tpu.memory_space<vmem>>, vector<1x1xf32>
    %cst_13 = arith.constant dense<0xFF800000> : vector<1xf32>
    %19 = vector.multi_reduction <maximumf>, %17, %cst_13 [0] : vector<8x1xf32> to vector<1xf32>
    %20 = vector.shape_cast %19 : vector<1xf32> to vector<1x1xf32>
    %21 = arith.maximumf %18, %20 : vector<1x1xf32>
    %22 = arith.subf %18, %21 : vector<1x1xf32>
    %23 = math.exp %22 : vector<1x1xf32>
    %24 = vector.broadcast %21 : vector<1x1xf32> to vector<8x1xf32>
    %25 = arith.subf %17, %24 : vector<8x1xf32>
    %26 = math.exp %25 : vector<8x1xf32>
    %c0_14 = arith.constant 0 : index
    %c0_15 = arith.constant 0 : index
    %27 = vector.load %arg8[%c0_14, %c0_15] : memref<1x1xf32, #tpu.memory_space<vmem>>, vector<1x1xf32>
    %28 = arith.mulf %23, %27 : vector<1x1xf32>
    %cst_16 = arith.constant dense<0.000000e+00> : vector<1xf32>
    %29 = vector.multi_reduction <add>, %26, %cst_16 [0] : vector<8x1xf32> to vector<1xf32>
    %30 = vector.shape_cast %29 : vector<1xf32> to vector<1x1xf32>
    %31 = arith.addf %28, %30 : vector<1x1xf32>
    %c0_17 = arith.constant 0 : index
    %c0_18 = arith.constant 0 : index
    %32 = vector.load %arg8[%c0_17, %c0_18] : memref<1x1xf32, #tpu.memory_space<vmem>>, vector<1x1xf32>
    tpu.vector_store %arg8[%c0_17, %c0_18], %31 {strides = array<i32>} : memref<1x1xf32, #tpu.memory_space<vmem>>, vector<1x1xf32>,
    %cst_19 = arith.constant 1.000000e+00 : f32
    %33 = vector.broadcast %cst_19 : f32 to vector<1x8xf32>
    %34 = vector.broadcast %26 : vector<8x1xf32> to vector<8x64xf32>
    %35 = arith.mulf %34, %12 : vector<8x64xf32>
    %cst_20 = arith.constant dense<0.000000e+00> : vector<1x64xf32>
    %36 = tpu.matmul %33, %35, %cst_20 {dimension_numbers = #tpu.dot_dimension_numbers<[1], [0], [0], [1], [0, 0, 1, 1], [], []>} : vector<1x8xf32>, vector<8x64xf32>, vector<1x64xf32> -> vector<1x64xf32>
    %c0_21 = arith.constant 0 : index
    %c0_22 = arith.constant 0 : index
    %37 = vector.load %arg9[%c0_21, %c0_22] : memref<1x64xf32, #tpu.memory_space<vmem>>, vector<1x64xf32>
    %38 = vector.broadcast %23 : vector<1x1xf32> to vector<1x64xf32>
    %39 = arith.mulf %38, %37 : vector<1x64xf32>
    %40 = arith.addf %39, %36 : vector<1x64xf32>
    %c0_23 = arith.constant 0 : index
    %c0_24 = arith.constant 0 : index
    %41 = vector.load %arg9[%c0_23, %c0_24] : memref<1x64xf32, #tpu.memory_space<vmem>>, vector<1x64xf32>
    tpu.vector_store %arg9[%c0_23, %c0_24], %40 {strides = array<i32>} : memref<1x64xf32, #tpu.memory_space<vmem>>, vector<1x64xf32>,
    %c0_25 = arith.constant 0 : index
    %c0_26 = arith.constant 0 : index
    %42 = vector.load %arg7[%c0_25, %c0_26] : memref<1x1xf32, #tpu.memory_space<vmem>>, vector<1x1xf32>
    tpu.vector_store %arg7[%c0_25, %c0_26], %21 {strides = array<i32>} : memref<1x1xf32, #tpu.memory_space<vmem>>, vector<1x1xf32>,
    %c0_i32_27 = arith.constant 0 : i32
    %43 = arith.cmpi eq, %arg1, %c0_i32_27 : i32
    %44 = arith.extui %43 : i1 to i32
    %c0_i32_28 = arith.constant 0 : i32
    %45 = arith.cmpi ne, %44, %c0_i32_28 : i32
    scf.if %45 {
      %c0_29 = arith.constant 0 : index
      %c0_30 = arith.constant 0 : index
      %46 = vector.load %arg9[%c0_29, %c0_30] : memref<1x64xf32, #tpu.memory_space<vmem>>, vector<1x64xf32>
      %c0_31 = arith.constant 0 : index
      %c0_32 = arith.constant 0 : index
      %47 = vector.load %arg8[%c0_31, %c0_32] : memref<1x1xf32, #tpu.memory_space<vmem>>, vector<1x1xf32>
      %48 = vector.broadcast %47 : vector<1x1xf32> to vector<1x64xf32>
      %49 = arith.divf %46, %48 : vector<1x64xf32>
      %50 = vector.shape_cast %49 : vector<1x64xf32> to vector<1x1x64xf32>
      %c0_33 = arith.constant 0 : index
      %c0_34 = arith.constant 0 : index
      %c0_35 = arith.constant 0 : index
      %51 = vector.load %arg6[%c0_33, %c0_34, %c0_35] : memref<1x1x64xf32, #tpu.memory_space<vmem>>, vector<1x1x64xf32>
      tpu.vector_store %arg6[%c0_33, %c0_34, %c0_35], %50 {strides = array<i32>} : memref<1x1x64xf32, #tpu.memory_space<vmem>>, vector<1x1x64xf32>,
    } else {
    }
    return
  }
  func.func @transform_0(%arg0: i32, %arg1: i32) -> (i32, i32, i32) {
    %c0_i32 = arith.constant 0 : i32
    %c0_i32_0 = arith.constant 0 : i32
    return %arg0, %arg1, %c0_i32 : i32, i32, i32
  }
  func.func @transform_1(%arg0: i32, %arg1: i32) -> (i32, i32) {
    %c0_i32 = arith.constant 0 : i32
    %c0_i32_0 = arith.constant 0 : i32
    %c0_i32_1 = arith.constant 0 : i32
    return %c0_i32, %c0_i32_0 : i32, i32
  }
  func.func @transform_2(%arg0: i32, %arg1: i32) -> (i32, i32) {
    %c0_i32 = arith.constant 0 : i32
    %c0_i32_0 = arith.constant 0 : i32
    %c0_i32_1 = arith.constant 0 : i32
    return %c0_i32, %c0_i32_0 : i32, i32
  }
  func.func @transform_3(%arg0: i32, %arg1: i32) -> (i32, i32) {
    %c0_i32 = arith.constant 0 : i32
    %c0_i32_0 = arith.constant 0 : i32
    %c0_i32_1 = arith.constant 0 : i32
    return %c0_i32, %c0_i32_0 : i32, i32
  }
  func.func @transform_4(%arg0: i32, %arg1: i32) -> (i32, i32, i32) {
    %c0_i32 = arith.constant 0 : i32
    %c0_i32_0 = arith.constant 0 : i32
    %c0_i32_1 = arith.constant 0 : i32
    return %arg0, %c0_i32, %c0_i32_0 : i32, i32, i32
  }
}

</mosaic_0001>

<llo_original>
// kernel: tpu_custom_call.1
$region0: #{tpu_custom_call.1}
  #allocation0 [shape = 'u32[]', space=smem, size = 0x4, offset = 0x4, fixed_abs, tag = 'smem constant byte address 0x4 - core index']
  #allocation1 [shape = 'u32[144,128]{1,0:T(1,128)}', space=vmem, size = 0x12000, scoped, tag = 'internal scratch']
  #allocation2 [shape = 'f32[1,1]{1,0:T(1,128)}', space=vmem, size = 0x200, scoped, tag = 'scratch operand']
  #allocation3 [shape = 'f32[1,1]{1,0:T(1,128)}', space=vmem, size = 0x200, scoped, tag = 'scratch operand']
  #allocation4 [shape = 'f32[1,64]{1,0:T(1,128)}', space=vmem, size = 0x200, scoped, tag = 'scratch operand']
  %s0 = inlined_call_operand.hbm [shape: f32[1,8,32], index: 0, kind: input, shape index: {}]
  %s1 = inlined_call_operand.hbm [shape: f32[32,64], index: 1, kind: input, shape index: {}]
  %s2 = inlined_call_operand.vmem [shape: f32[1,64], index: 2, kind: input, shape index: {}]
  %s3 = inlined_call_operand.vmem [shape: f32[1,64], index: 3, kind: input, shape index: {}]
  %s4 = inlined_call_operand.hbm [shape: f32[1,1,64], index: 4, kind: output, shape index: {}]
  %s5 = sld [smem:[#allocation0]]
  $region42: #{tpu_custom_call.1} parent=0
    _
  %s7 = ssub.s32 1, %s5
  %s8 = scalar_select 0, %s7, %s5
  $region1: #{tpu_custom_call.1} parent=0
    #allocation5 [shape = 'u8[4096]{0}', space=vmem, size = 0x1000, scoped, tag = 'input window, operand 0, single buffered']
    #allocation6 [shape = 's32[1]{0}', space=sflag, size = 0x4, scoped, tag = 'scoped memory for tpu_custom_call.1']
    #allocation7 [shape = 's32[1]{0}', space=sflag, size = 0x4, scoped, tag = 'scoped memory for tpu_custom_call.1']
    #allocation8 [shape = 'u8[16384]{0}', space=vmem, size = 0x4000, scoped, tag = 'input window, operand 1, single buffered']
    #allocation9 [shape = 's32[1]{0}', space=sflag, size = 0x4, scoped, tag = 'scoped memory for tpu_custom_call.1']
    #allocation10 [shape = 'u8[512]{0}', space=vmem, size = 0x400, scoped, tag = 'output window, operand 0, single buffered']
    %9 = vsyncpa [#allocation6], 0
    %10 = vsyncpa [#allocation9], 0
    %11 = vsyncpa [#allocation7], 0
    // Predicated region
    $region2: #{tpu_custom_call.1} parent=1 // pred_check
      _
    $region3: #{tpu_custom_call.1} parent=1 // pred_check_branch
      %13 = sbr.rel (0) target = $region5
    $region4: #{tpu_custom_call.1} parent=1 // pred_region
      %s15 = ssub.s32 128, 128
      %16 = vsyncadd [#allocation6], %s15
      %s18 = sshll.u32 [#allocation5], 4
      %s19 = int_to_ptr.vmem [resolvable:$true] %s18
      %21 = dma.hbm_to_vmem [thread:$0]  %s0, 128, %s19, [#allocation6]
    $region5: #{tpu_custom_call.1} parent=1 // pred_fallthru
      _
    // Predicated region
    $region6: #{tpu_custom_call.1} parent=1 // pred_check
      _
    $region7: #{tpu_custom_call.1} parent=1 // pred_check_branch
      %23 = sbr.rel (0) target = $region9
    $region8: #{tpu_custom_call.1} parent=1 // pred_region
      %s25 = ssub.s32 512, 512
      %26 = vsyncadd [#allocation9], %s25
      %s27 = sshll.u32 [#allocation8], 4
      %s28 = int_to_ptr.vmem [resolvable:$true] %s27
      %33 = dma.hbm_to_vmem [thread:$0]  %s1, 512, %s28, [#allocation9], 128, 128, 8
    $region9: #{tpu_custom_call.1} parent=1 // pred_fallthru
      _
    // Predicated region
    $region10: #{tpu_custom_call.1} parent=1 // pred_check
      _
    $region11: #{tpu_custom_call.1} parent=1 // pred_check_branch
      %35 = sbr.rel (0) target = $region13
    $region12: #{tpu_custom_call.1} parent=1 // pred_region
      _
    $region13: #{tpu_custom_call.1} parent=1 // pred_fallthru
      _
    // Predicated region
    $region14: #{tpu_custom_call.1} parent=1 // pred_check
      _
    $region15: #{tpu_custom_call.1} parent=1 // pred_check_branch
      %37 = sbr.rel (0) target = $region17
    $region16: #{tpu_custom_call.1} parent=1 // pred_region
      _
    $region17: #{tpu_custom_call.1} parent=1 // pred_fallthru
      _
    // Predicated region
    $region18: #{tpu_custom_call.1} parent=1 // pred_check
      _
    $region19: #{tpu_custom_call.1} parent=1 // pred_check_branch
      %39 = sbr.rel (0) target = $region21
    $region20: #{tpu_custom_call.1} parent=1 // pred_region
      %40 = dma.done [#allocation6], 128
    $region21: #{tpu_custom_call.1} parent=1 // pred_fallthru
      _
    // Predicated region
    $region22: #{tpu_custom_call.1} parent=1 // pred_check
      _
    $region23: #{tpu_custom_call.1} parent=1 // pred_check_branch
      %42 = sbr.rel (0) target = $region25
    $region24: #{tpu_custom_call.1} parent=1 // pred_region
      %43 = dma.done [#allocation9], 512
    $region25: #{tpu_custom_call.1} parent=1 // pred_fallthru
      _
    %p44 = scmp.eq.s32.totalorder 0, 0
    // Predicated region
    $region26: #{tpu_custom_call.1} parent=1 // pred_check
      %p45 = pneg %p44
    $region27: #{tpu_custom_call.1} parent=1 // pred_check_branch
      %47 = sbr.rel (%p45) target = $region29
    $region28: #{tpu_custom_call.1} parent=1 // pred_region
      %vm48 = vcmask 0
      %49 = vst.msk [vmem:[#allocation2] sm:$0x1] %vm48, -inf
      %50 = vst.msk [vmem:[#allocation3] sm:$0x1] %vm48, 0.0
      %vm51 = vcmask 516096
      %52 = vst.msk [vmem:[#allocation4] sm:$0x1] %vm51, 0.0
    $region29: #{tpu_custom_call.1} parent=1 // pred_fallthru
      _
    %v53 = vld [vmem:[#allocation5] sm:$0xff]
    %v54 = vld [vmem:[#allocation8] sm:$0xff]
    %v55 = vld [vmem:[#allocation8 + $0x8] sm:$0xff]
    %v56 = vld [vmem:[#allocation8 + $0x10] sm:$0xff]
    %v57 = vld [vmem:[#allocation8 + $0x18] sm:$0xff]
    %v58 = vld [vmem:[%s2] sm:$0x1]
    %v60 = vlaneseq
    %v61 = vshrl.u32 %v60, 7
    %v62 = vsub.s32 0, %v61
    %v63 = vrot.slane %v58, %v62
    %vm65 = vcmask 261120
    %v67 = vsel %vm65, %v53, 0
    %69 = vmatprep.subr.mxu0 0.0
    %70 = vmatpush1.msra.mxu0 %v54
    %71 = vmatprep.subr.mxu0 0.0
    %72 = vmatpush1.msra.mxu0 %v55
    %73 = vmatprep.subr.mxu0 0.0
    %74 = vmatpush1.msra.mxu0 %v56
    %75 = vmatprep.subr.mxu0 0.0
    %76 = vmatpush1.msra.mxu0 %v57
    %77 = vmatprep.subr.mxu0 0.0
    %78 = vmatpush1.msra.mxu0 0.0
    %79 = vmatprep.subr.mxu0 0.0
    %80 = vmatpush1.msra.mxu0 0.0
    %81 = vmatprep.subr.mxu0 0.0
    %82 = vmatpush1.msra.mxu0 0.0
    %83 = vmatprep.subr.mxu0 0.0
    %84 = vmatpush1.msra.mxu0 0.0
    %85 = vmatprep.subr.mxu0 0.0
    %86 = vmatpush1.msra.mxu0 0.0
    %87 = vmatprep.subr.mxu0 0.0
    %88 = vmatpush1.msra.mxu0 0.0
    %89 = vmatprep.subr.mxu0 0.0
    %90 = vmatpush1.msra.mxu0 0.0
    %91 = vmatprep.subr.mxu0 0.0
    %92 = vmatpush1.msra.mxu0 0.0
    %93 = vmatprep.subr.mxu0 0.0
    %94 = vmatpush1.msra.mxu0 0.0
    %95 = vmatprep.subr.mxu0 0.0
    %96 = vmatpush1.msra.mxu0 0.0
    %97 = vmatprep.subr.mxu0 0.0
    %98 = vmatpush1.msra.mxu0 0.0
    %99 = vmatprep.subr.mxu0 0.0
    %100 = vmatpush1.msra.mxu0 0.0
    %101 = vmatprep.subr.mxu0 0.0
    %102 = vmatpush1.msra.mxu0 0.0
    %103 = vmatprep.subr.mxu0 0.0
    %104 = vmatpush1.msra.mxu0 0.0
    %105 = vmatprep.subr.mxu0 0.0
    %106 = vmatpush1.msra.mxu0 0.0
    %107 = vmatprep.subr.mxu0 0.0
    %108 = vmatpush1.msra.mxu0 0.0
    %109 = vmatprep.subr.mxu0 0.0
    %110 = vmatpush1.msra.mxu0 0.0
    %111 = vmatprep.subr.mxu0 0.0
    %112 = vmatpush1.msra.mxu0 0.0
    %113 = vmatprep.subr.mxu0 0.0
    %114 = vmatpush1.msra.mxu0 0.0
    %115 = vmatprep.subr.mxu0 0.0
    %116 = vmatpush1.msra.mxu0 0.0
    %117 = vmatprep.subr.mxu0 0.0
    %118 = vmatpush1.msra.mxu0 0.0
    %119 = vmatprep.subr.mxu0 0.0
    %120 = vmatpush1.msra.mxu0 0.0
    %121 = vmatprep.subr.mxu0 0.0
    %122 = vmatpush1.msra.mxu0 0.0
    %123 = vmatprep.subr.mxu0 0.0
    %124 = vmatpush1.msra.mxu0 0.0
    %125 = vmatprep.subr.mxu0 0.0
    %126 = vmatpush1.msra.mxu0 0.0
    %127 = vmatprep.subr.mxu0 0.0
    %128 = vmatpush1.msra.mxu0 0.0
    %129 = vmatprep.subr.mxu0 0.0
    %130 = vmatpush1.msra.mxu0 0.0
    %131 = vmatprep.subr.mxu0 0.0
    %132 = vmatpush1.msra.mxu0 0.0
    %133 = vmatprep.mubr.f32.mxu0 0.0
    %134 = vmatmul.mubr.f32.gmra.mrb[0].mxu0 %v67
    %v135 = vpop.f32.mrb[0].mxu0
    %v136 = vadd.f32 %v63, %v135
    %v137 = vpop.f32.mrb[0].mxu0
    %138 = vdwg.mxu0
    %v139 = vmul.f32 %v136, 0.2
    %v140 = vmax.f32 %v136, %v139
    %v141 = vld [vmem:[%s3] sm:$0x1]
    %v143 = vlaneseq
    %v144 = vshrl.u32 %v143, 7
    %v145 = vsub.s32 0, %v144
    %v146 = vrot.slane %v141, %v145
    %v148 = vmul.f32 %v140, %v146
    %vm149 = vcmask 523264
    %v150 = vsel %vm149, %v148, 0.0
    %151 = vadd.xlane.f32.xlu0 %v150
    %v152 = vpop.xlane.xlu0 %151
    %v153 = vld [vmem:[#allocation2] sm:$0x1]
    %v154 = vrot.slane %v152, 4
    %v155 = vmax.f32 %v152, %v154
    %v156 = vrot.slane %v155, 2
    %v157 = vmax.f32 %v155, %v156
    %v158 = vrot.slane %v157, 1
    %v159 = vmax.f32 %v157, %v158
    %v160 = vmax.f32 %v153, %v159
    %v161 = vsub.f32 %v153, %v160
    %v162 = vmul.f32 %v161, 1.442695
    %v163 = vpow.pop %v162
    %v165 = vlaneseq
    %v166 = vshrl.u32 %v165, 7
    %v167 = vsub.s32 0, %v166
    %v168 = vrot.slane %v160, %v167
    %v170 = vsub.f32 %v152, %v168
    %v171 = vmul.f32 %v170, 1.442695
    %v172 = vpow.pop %v171
    %v173 = vld [vmem:[#allocation3] sm:$0x1]
    %v174 = vmul.f32 %v163, %v173
    %vm175 = vcmask 7168
    %v176 = vsel %vm175, %v172, 0.0
    %v177 = vrot.slane %v176, 4
    %v178 = vadd.f32 %v176, %v177
    %v179 = vrot.slane %v178, 2
    %v180 = vadd.f32 %v178, %v179
    %v181 = vrot.slane %v180, 1
    %v182 = vadd.f32 %v180, %v181
    %v183 = vadd.f32 %v174, %v182
    %vm184 = vcmask 0
    %185 = vst.msk [vmem:[#allocation3] sm:$0x1] %vm184, %v183
    %187 = vset.pattern.permute.xlu0 0
    %188 = vperm.xlu0 %187, %v172
    %v189 = vpop.permute.xlu0 %188
    %v191 = vmul.f32 %v189, %v140
    %vm192 = vcmask 64512
    %v194 = vsel %vm192, 1.0, 0
    %196 = vmatprep.subr.mxu0 0.0
    %197 = vmatpush1.msra.mxu0 %v191
    %198 = vmatprep.subr.mxu0 0.0
    %199 = vmatpush1.msra.mxu0 0.0
    %200 = vmatprep.subr.mxu0 0.0
    %201 = vmatpush1.msra.mxu0 0.0
    %202 = vmatprep.subr.mxu0 0.0
    %203 = vmatpush1.msra.mxu0 0.0
    %204 = vmatprep.subr.mxu0 0.0
    %205 = vmatpush1.msra.mxu0 0.0
    %206 = vmatprep.subr.mxu0 0.0
    %207 = vmatpush1.msra.mxu0 0.0
    %208 = vmatprep.subr.mxu0 0.0
    %209 = vmatpush1.msra.mxu0 0.0
    %210 = vmatprep.subr.mxu0 0.0
    %211 = vmatpush1.msra.mxu0 0.0
    %212 = vmatprep.subr.mxu0 0.0
    %213 = vmatpush1.msra.mxu0 0.0
    %214 = vmatprep.subr.mxu0 0.0
    %215 = vmatpush1.msra.mxu0 0.0
    %216 = vmatprep.subr.mxu0 0.0
    %217 = vmatpush1.msra.mxu0 0.0
    %218 = vmatprep.subr.mxu0 0.0
    %219 = vmatpush1.msra.mxu0 0.0
    %220 = vmatprep.subr.mxu0 0.0
    %221 = vmatpush1.msra.mxu0 0.0
    %222 = vmatprep.subr.mxu0 0.0
    %223 = vmatpush1.msra.mxu0 0.0
    %224 = vmatprep.subr.mxu0 0.0
    %225 = vmatpush1.msra.mxu0 0.0
    %226 = vmatprep.subr.mxu0 0.0
    %227 = vmatpush1.msra.mxu0 0.0
    %228 = vmatprep.subr.mxu0 0.0
    %229 = vmatpush1.msra.mxu0 0.0
    %230 = vmatprep.subr.mxu0 0.0
    %231 = vmatpush1.msra.mxu0 0.0
    %232 = vmatprep.subr.mxu0 0.0
    %233 = vmatpush1.msra.mxu0 0.0
    %234 = vmatprep.subr.mxu0 0.0
    %235 = vmatpush1.msra.mxu0 0.0
    %236 = vmatprep.subr.mxu0 0.0
    %237 = vmatpush1.msra.mxu0 0.0
    %238 = vmatprep.subr.mxu0 0.0
    %239 = vmatpush1.msra.mxu0 0.0
    %240 = vmatprep.subr.mxu0 0.0
    %241 = vmatpush1.msra.mxu0 0.0
    %242 = vmatprep.subr.mxu0 0.0
    %243 = vmatpush1.msra.mxu0 0.0
    %244 = vmatprep.subr.mxu0 0.0
    %245 = vmatpush1.msra.mxu0 0.0
    %246 = vmatprep.subr.mxu0 0.0
    %247 = vmatpush1.msra.mxu0 0.0
    %248 = vmatprep.subr.mxu0 0.0
    %249 = vmatpush1.msra.mxu0 0.0
    %250 = vmatprep.subr.mxu0 0.0
    %251 = vmatpush1.msra.mxu0 0.0
    %252 = vmatprep.subr.mxu0 0.0
    %253 = vmatpush1.msra.mxu0 0.0
    %254 = vmatprep.subr.mxu0 0.0
    %255 = vmatpush1.msra.mxu0 0.0
    %256 = vmatprep.subr.mxu0 0.0
    %257 = vmatpush1.msra.mxu0 0.0
    %258 = vmatprep.subr.mxu0 0.0
    %259 = vmatpush1.msra.mxu0 0.0
    %260 = vmatprep.mubr.f32.mxu0 0.0
    %261 = vmatmul.mubr.f32.gmra.mrb[0].mxu0 %v194
    %v262 = vpop.f32.mrb[0].mxu0
    %v263 = vadd.f32 0.0, %v262
    %v264 = vpop.f32.mrb[0].mxu0
    %265 = vdwg.mxu0
    %v266 = vld [vmem:[#allocation4] sm:$0x1]
    %268 = vset.pattern.permute.xlu0 0
    %269 = vperm.xlu0 %268, %v163
    %v270 = vpop.permute.xlu0 %269
    %v272 = vlaneseq
    %v273 = vshrl.u32 %v272, 7
    %v274 = vsub.s32 0, %v273
    %v275 = vrot.slane %v270, %v274
    %v276 = vmul.f32 %v275, %v266
    %v277 = vadd.f32 %v276, %v263
    %vm278 = vcmask 516096
    %279 = vst.msk [vmem:[#allocation4] sm:$0x1] %vm278, %v277
    %280 = vst.msk [vmem:[#allocation2] sm:$0x1] %vm184, %v160
    // Predicated region
    $region30: #{tpu_custom_call.1} parent=1 // pred_check
      %p281 = pneg %p44
    $region31: #{tpu_custom_call.1} parent=1 // pred_check_branch
      %283 = sbr.rel (%p281) target = $region33
    $region32: #{tpu_custom_call.1} parent=1 // pred_region
      %v284 = vld [vmem:[#allocation4] sm:$0x1]
      %v285 = vld [vmem:[#allocation3] sm:$0x1]
      %287 = vset.pattern.permute.xlu0 0
      %288 = vperm.xlu0 %287, %v285
      %v289 = vpop.permute.xlu0 %288
      %v291 = vlaneseq
      %v292 = vshrl.u32 %v291, 7
      %v293 = vsub.s32 0, %v292
      %v294 = vrot.slane %v289, %v293
      %v295 = vrcp.pop %v294
      %v296 = vmul.f32 %v284, %v295
      %297 = vst.msk [vmem:[#allocation10] sm:$0x1] %vm278, %v296
    $region33: #{tpu_custom_call.1} parent=1 // pred_fallthru
      _
    // Predicated region
    $region34: #{tpu_custom_call.1} parent=1 // pred_check
      _
    $region35: #{tpu_custom_call.1} parent=1 // pred_check_branch
      %299 = sbr.rel (0) target = $region37
    $region36: #{tpu_custom_call.1} parent=1 // pred_region
      %s301 = ssub.s32 16, 16
      %302 = vsyncadd [#allocation7], %s301
      %s304 = sshll.u32 [#allocation10], 4
      %s305 = int_to_ptr.vmem [resolvable:$true] %s304
      %307 = dma.vmem_to_hbm [thread:$0]  %s305, 16, %s4, [#allocation7]
    $region37: #{tpu_custom_call.1} parent=1 // pred_fallthru
      _
    // Predicated region
    $region38: #{tpu_custom_call.1} parent=1 // pred_check
      _
    $region39: #{tpu_custom_call.1} parent=1 // pred_check_branch
      %309 = sbr.rel (0) target = $region41
    $region40: #{tpu_custom_call.1} parent=1 // pred_region
      %310 = dma.done [#allocation7], 16
    $region41: #{tpu_custom_call.1} parent=1 // pred_fallthru
      _
    %311 = vsyncpa [#allocation6], 1
    %312 = vsyncpa [#allocation9], 1
    %313 = vsyncpa [#allocation7], 1

</llo_original>
